<compile_context>
chip_gen: v5e
topology: v5e:2x2
jax: 0.10.0
libtpu: 0.0.40
codegen_flags: <defaults>
</compile_context>

<pallas_src>
import math

import jax
import jax.numpy as jnp
from jax.experimental import pallas as pl
from jax.experimental.pallas import tpu as pltpu

_EPS = 1e-8  # torch.cosine_similarity default eps
# TODO(synk): eps is applied as max(sqrt(w1*w2), eps) (old-torch style); recent
# torch clamps each norm separately — differs only for near-zero pairs.

_LANE_CANDIDATES = (2048, 1024, 512, 256, 128)
_TARGET_BLOCK_ROWS = 512  # ~4 MiB f32 tile at L=2048; fits v7x's 64 MiB VMEM


def _cosin_loss_kernel(t_ref, p_ref, m_ref, o_ref):
    # Grid = (num_partials, steps). Axis 0: independent partial sums (one
    # resident (8, L) output block each -> both TensorCores on v7x/megacore).
    # Axis 1: sequential accumulation into the resident block.
    step = pl.program_id(1)

    @pl.when(step == 0)
    def _init():
        o_ref[...] = jnp.zeros_like(o_ref)

    t = t_ref[...].astype(jnp.float32)
    p = p_ref[...].astype(jnp.float32)

    rows, L = t.shape  # rows % 8 == 0, L % 128 == 0 (so L is even)

    # Pairs are adjacent lanes (2i, 2i+1) and never straddle a row (L even).
    # roll(x, L-1, axis=1): lane k now holds element k+1 (XLU op, off the VPU
    # critical path). Products first (3 VALU muls), then roll+add per term.
    # Odd lanes (and the roll wrap-around, which lands on lane L-1, odd) hold
    # garbage; it is bounded (|sim| <= 1) and dropped in the wrapper.
    tp = t * p
    dot = tp + pltpu.roll(tp, shift=L - 1, axis=1)   # even lanes: <t_pair, p_pair>
    tt = t * t
    w1 = tt + pltpu.roll(tt, shift=L - 1, axis=1)    # |t_pair|^2
    pp = p * p
    w2 = pp + pltpu.roll(pp, shift=L - 1, axis=1)    # |p_pair|^2

    # sim = dot / max(sqrt(w1*w2), eps) == dot * rsqrt(max(w1*w2, eps^2))  (EUP)
    sim = dot * jax.lax.rsqrt(jnp.maximum(w1 * w2, _EPS * _EPS))

    m = m_ref[...].astype(jnp.float32)
    contrib = (1.0 - sim) * m  # even lanes: real contribution; odd lanes dropped later

    # Fold (rows, L) -> (8, L): layout-preserving reshape + pure VALU adds.
    if rows > 8:
        contrib = contrib.reshape(rows // 8, 8, L).sum(axis=0)
    o_ref[...] += contrib


def _round_up(x, m):
    return ((x + m - 1) // m) * m


def _device_caps():
    """(default num_partials, vmem_limit_bytes) from the attached TPU."""
    kind = ""
    try:
        kind = jax.devices()[0].device_kind.lower()
    except Exception:
        pass
    vmem_phys = None
    try:
        vmem_phys = int(pltpu.get_tpu_info().vmem_capacity_bytes)
    except Exception:
        vmem_phys = None
    if vmem_phys is None or vmem_phys <= 0:
        # v7x has 64 MiB/TC; v5e/v6e have 128 MiB. Unknown -> conservative.
        vmem_phys = (128 << 20) if any(s in kind for s in ("v5", "v6")) else (64 << 20)
    # The "parallel" grid axis only buys anything on parts with 2 TCs per device.
    two_cores = any(s in kind for s in ("v7", "v4", "v3", "v5p"))
    budget = min(vmem_phys - (8 << 20), 96 << 20)
    budget = max(budget, 32 << 20)
    return (2 if two_cores else 1), int(budget)


def _select_tiling(total, lane_width, block_rows, num_partials, npart_default,
                   vmem_budget, in_itemsize_sum):
    """Returns (L, num_partials, block_rows, steps, rows_total, pad)."""
    # 1) Lane width: largest candidate giving an exact, sublane-full tiling
    #    (pad == 0 whenever total % 1024 == 0 — the common NCHW case).
    if lane_width is None:
        L = 128
        for cand in _LANE_CANDIDATES:
            if total % (8 * cand) == 0:
                L = cand
                break
    else:
        assert lane_width % 128 == 0 and lane_width > 0
        L = lane_width
    rows = _round_up(max(-(-total // L), 1), 8)  # ceil rows, sublane-full

    # 2) Independent partial sums. Needs rows % (8 * npart) == 0 so each
    #    partial still gets whole (8, L) folds; otherwise fall back to 1.
    npart = npart_default if num_partials is None else int(num_partials)
    if npart < 1 or rows % (8 * npart) != 0:
        npart = 1
    per_part = rows // npart

    # 3) Rows per grid step: largest multiple of 8 dividing per_part that is
    #    <= target and whose conservative VMEM estimate fits the budget
    #    (double-buffered inputs + ~6 live f32 full-tile temporaries).
    target = _TARGET_BLOCK_ROWS if block_rows is None else max(8, _round_up(block_rows, 8))
    per_row_bytes = L * (2 * in_itemsize_sum + 6 * 4)
    fit_rows = max(8, int((vmem_budget - (4 << 20)) // per_row_bytes) // 8 * 8)
    target = min(target, fit_rows, per_part)
    br = 8
    for k in range(target // 8, 0, -1):
        if per_part % (8 * k) == 0:
            br = 8 * k
            break
    steps = per_part // br
    pad = rows * L - total
    return L, npart, br, steps, rows, pad


def cosin_loss(pred, target, mask, *, lane_width=None, block_rows=None,
               num_partials=None, interpret=False):
    """Pallas TPU implementation of CosinLoss.forward. Returns a scalar f32."""
    assert pred.shape == target.shape == mask.shape
    assert pred.ndim >= 2, "expects (batch, ...) inputs like the torch module"
    per_sample = math.prod(pred.shape[1:])
    assert per_sample % 2 == 0, "reshape(B, -1, 2) needs an even per-sample size"
    total = pred.shape[0] * per_sample
    assert total > 0

    # Bool masks: cast once in the wrapper (the math needs a float multiply).
    # Narrow float dtypes (bf16) pass straight through — less HBM traffic.
    if mask.dtype == jnp.bool_:
        mask = mask.astype(jnp.float32)

    npart_default, vmem_budget = _device_caps()
    in_itemsize_sum = (jnp.dtype(target.dtype).itemsize
                       + jnp.dtype(pred.dtype).itemsize
                       + jnp.dtype(mask.dtype).itemsize)
    L, npart, br, steps, rows_total, pad = _select_tiling(
        total, lane_width, block_rows, num_partials, npart_default,
        vmem_budget, in_itemsize_sum)

    t = target.reshape(-1)   # contiguous reshapes: free (bitcast), no copies
    p = pred.reshape(-1)
    m = mask.reshape(-1)
    if pad:
        # Rare fallback (element count not divisible by 1024): zero padding is
        # exact — padded pairs have mask == 0 so they contribute nothing and
        # rsqrt(max(0, eps^2)) stays finite.
        # TODO(synk): replace with an in-kernel masked tail step to avoid the
        # jnp.pad copies on awkward shapes.
        t = jnp.pad(t, (0, pad))
        p = jnp.pad(p, (0, pad))
        m = jnp.pad(m, (0, pad))

    t = t.reshape(rows_total, L)
    p = p.reshape(rows_total, L)
    m = m.reshape(rows_total, L)

    in_spec = pl.BlockSpec((br, L), lambda c, i: (c * steps + i, 0))
    out_spec = pl.BlockSpec((8, L), lambda c, i: (0, c))

    n_elems = rows_total * L
    out_bytes = 8 * L * npart * 4
    cost = pl.CostEstimate(
        flops=int(12 * n_elems),
        transcendentals=int(n_elems),
        bytes_accessed=int(n_elems * in_itemsize_sum + out_bytes),
    )

    partials = pl.pallas_call(
        _cosin_loss_kernel,
        out_shape=jax.ShapeDtypeStruct((8, L * npart), jnp.float32),
        grid=(npart, steps),
        in_specs=[in_spec, in_spec, in_spec],
        out_specs=out_spec,
        compiler_params=pltpu.CompilerParams(
            dimension_semantics=("parallel", "arbitrary"),
            vmem_limit_bytes=int(vmem_budget),
        ),
        cost_estimate=cost,
        interpret=interpret,
    )(t, p, m)

    # Even lanes hold the real per-pair contributions; odd lanes are the
    # bounded garbage from the in-kernel roll trick (parity mask deferred to
    # this tiny reduction — it MUST stay here for correctness).
    return jnp.sum(partials[:, 0::2])


def _reference(pred, target, mask):
    B = pred.shape[0]
    tr = target.reshape(B, -1, 2).astype(jnp.float32)
    pr = pred.reshape(B, -1, 2).astype(jnp.float32)
    mr = mask.reshape(B, -1, 2).astype(jnp.float32)
    dot = jnp.sum(tr * pr, axis=-1)
    denom = jnp.maximum(
        jnp.sqrt(jnp.sum(tr * tr, axis=-1) * jnp.sum(pr * pr, axis=-1)), _EPS
    )
    sim = dot / denom
    return jnp.sum((1.0 - sim) * mr[..., 0])


if __name__ == "__main__":
    key = jax.random.PRNGKey(0)
    k1, k2, k3 = jax.random.split(key, 3)

    # Case 1: small NCHW shape; auto tiling hits the exact-fit (pad == 0) path.
    B, C, H, W = 2, 4, 16, 16
    pred = jax.random.normal(k1, (B, C, H, W), dtype=jnp.float32)
    target = jax.random.normal(k2, (B, C, H, W), dtype=jnp.float32)
    mask = (jax.random.uniform(k3, (B, C, H, W)) > 0.5).astype(jnp.float32)

    loss = cosin_loss(pred, target, mask)
    jax.block_until_ready(loss)
    ref = _reference(pred, target, mask)
    assert jnp.allclose(loss, ref, rtol=1e-5, atol=1e-4), (loss, ref)

    # Case 2: explicit small tiles so the (partials x steps) accumulation grid
    # is exercised (grid = (2, 4), still zero padding).
    k4, k5, k6 = jax.random.split(jax.random.PRNGKey(1), 3)
    B2, C2, H2, W2 = 2, 8, 32, 32
    pred2 = jax.random.normal(k4, (B2, C2, H2, W2), dtype=jnp.float32)
    target2 = jax.random.normal(k5, (B2, C2, H2, W2), dtype=jnp.float32)
    mask2 = (jax.random.uniform(k6, (B2, C2, H2, W2)) > 0.5).astype(jnp.float32)

    loss2 = cosin_loss(pred2, target2, mask2,
                       lane_width=256, block_rows=8, num_partials=2)
    jax.block_until_ready(loss2)
    ref2 = _reference(pred2, target2, mask2)
    assert jnp.allclose(loss2, ref2, rtol=1e-5, atol=1e-4), (loss2, ref2)

    # Case 3: awkward element count (not divisible by 1024) -> exercises the
    # rare zero-pad fallback path (per-sample count 90 is even, as required).
    k7, k8, k9 = jax.random.split(jax.random.PRNGKey(2), 3)
    B3, C3, H3, W3 = 2, 3, 5, 6
    pred3 = jax.random.normal(k7, (B3, C3, H3, W3), dtype=jnp.float32)
    target3 = jax.random.normal(k8, (B3, C3, H3, W3), dtype=jnp.float32)
    mask3 = (jax.random.uniform(k9, (B3, C3, H3, W3)) > 0.5).astype(jnp.float32)

    loss3 = cosin_loss(pred3, target3, mask3)
    jax.block_until_ready(loss3)
    ref3 = _reference(pred3, target3, mask3)
    assert jnp.allclose(loss3, ref3, rtol=1e-5, atol=1e-4), (loss3, ref3)

    print("KERNEL_OK")
</pallas_src>

<mosaic_0001>
module attributes {stable_mosaic.version = 11 : i64} {
  func.func @_cosin_loss_kernel(%arg0: i32, %arg1: i32, %arg2: memref<8x256xf32, #tpu.memory_space<vmem>>, %arg3: memref<8x256xf32, #tpu.memory_space<vmem>>, %arg4: memref<8x256xf32, #tpu.memory_space<vmem>>, %arg5: memref<8x256xf32, #tpu.memory_space<vmem>>) attributes {dimension_semantics = [#tpu.dimension_semantics<parallel>, #tpu.dimension_semantics<arbitrary>], iteration_bounds = array<i64: 1, 1>, scalar_prefetch = 0 : i64, scratch_operands = 0 : i64, tpu.core_type = #tpu.core_type<tc>, window_params = [{transform_indices = @transform_0, window_bounds = array<i64: 8, 256>}, {transform_indices = @transform_1, window_bounds = array<i64: 8, 256>}, {transform_indices = @transform_2, window_bounds = array<i64: 8, 256>}, {transform_indices = @transform_3, window_bounds = array<i64: 8, 256>}]} {
    %c0_i32 = arith.constant 0 : i32
    %0 = arith.cmpi eq, %arg1, %c0_i32 : i32
    %1 = arith.extui %0 : i1 to i32
    %c0_i32_0 = arith.constant 0 : i32
    %2 = arith.cmpi ne, %1, %c0_i32_0 : i32
    scf.if %2 {
      %cst_13 = arith.constant 0.000000e+00 : f32
      %26 = vector.broadcast %cst_13 : f32 to vector<8x256xf32>
      %c0_14 = arith.constant 0 : index
      %c0_15 = arith.constant 0 : index
      %27 = vector.load %arg5[%c0_14, %c0_15] : memref<8x256xf32, #tpu.memory_space<vmem>>, vector<8x256xf32>
      tpu.vector_store %arg5[%c0_14, %c0_15], %26 {strides = array<i32>} : memref<8x256xf32, #tpu.memory_space<vmem>>, vector<8x256xf32>,
    } else {
    }
    %c0 = arith.constant 0 : index
    %c0_1 = arith.constant 0 : index
    %3 = vector.load %arg2[%c0, %c0_1] : memref<8x256xf32, #tpu.memory_space<vmem>>, vector<8x256xf32>
    %c0_2 = arith.constant 0 : index
    %c0_3 = arith.constant 0 : index
    %4 = vector.load %arg3[%c0_2, %c0_3] : memref<8x256xf32, #tpu.memory_space<vmem>>, vector<8x256xf32>
    %5 = arith.mulf %3, %4 : vector<8x256xf32>
    %c255_i32 = arith.constant 255 : i32
    %6 = tpu.dynamic_rotate %5 by %c255_i32 dim 1 : vector<8x256xf32>, i32 -> vector<8x256xf32>
    %7 = arith.addf %5, %6 : vector<8x256xf32>
    %8 = arith.mulf %3, %3 : vector<8x256xf32>
    %c255_i32_4 = arith.constant 255 : i32
    %9 = tpu.dynamic_rotate %8 by %c255_i32_4 dim 1 : vector<8x256xf32>, i32 -> vector<8x256xf32>
    %10 = arith.addf %8, %9 : vector<8x256xf32>
    %11 = arith.mulf %4, %4 : vector<8x256xf32>
    %c255_i32_5 = arith.constant 255 : i32
    %12 = tpu.dynamic_rotate %11 by %c255_i32_5 dim 1 : vector<8x256xf32>, i32 -> vector<8x256xf32>
    %13 = arith.addf %11, %12 : vector<8x256xf32>
    %14 = arith.mulf %10, %13 : vector<8x256xf32>
    %cst = arith.constant 1.000000e-16 : f32
    %15 = vector.broadcast %cst : f32 to vector<8x256xf32>
    %16 = arith.maximumf %14, %15 : vector<8x256xf32>
    %17 = math.rsqrt %16 : vector<8x256xf32>
    %18 = arith.mulf %7, %17 : vector<8x256xf32>
    %c0_6 = arith.constant 0 : index
    %c0_7 = arith.constant 0 : index
    %19 = vector.load %arg4[%c0_6, %c0_7] : memref<8x256xf32, #tpu.memory_space<vmem>>, vector<8x256xf32>
    %cst_8 = arith.constant 1.000000e+00 : f32
    %20 = vector.broadcast %cst_8 : f32 to vector<8x256xf32>
    %21 = arith.subf %20, %18 : vector<8x256xf32>
    %22 = arith.mulf %21, %19 : vector<8x256xf32>
    %c0_9 = arith.constant 0 : index
    %c0_10 = arith.constant 0 : index
    %23 = vector.load %arg5[%c0_9, %c0_10] : memref<8x256xf32, #tpu.memory_space<vmem>>, vector<8x256xf32>
    %24 = arith.addf %23, %22 : vector<8x256xf32>
    %c0_11 = arith.constant 0 : index
    %c0_12 = arith.constant 0 : index
    %25 = vector.load %arg5[%c0_11, %c0_12] : memref<8x256xf32, #tpu.memory_space<vmem>>, vector<8x256xf32>
    tpu.vector_store %arg5[%c0_11, %c0_12], %24 {strides = array<i32>} : memref<8x256xf32, #tpu.memory_space<vmem>>, vector<8x256xf32>,
    return
  }
  func.func @transform_0(%arg0: i32, %arg1: i32) -> (i32, i32) {
    %c1_i32 = arith.constant 1 : i32
    %0 = arith.muli %arg0, %c1_i32 : i32
    %1 = arith.addi %0, %arg1 : i32
    %c0_i32 = arith.constant 0 : i32
    %c0_i32_0 = arith.constant 0 : i32
    return %1, %c0_i32 : i32, i32
  }
  func.func @transform_1(%arg0: i32, %arg1: i32) -> (i32, i32) {
    %c1_i32 = arith.constant 1 : i32
    %0 = arith.muli %arg0, %c1_i32 : i32
    %1 = arith.addi %0, %arg1 : i32
    %c0_i32 = arith.constant 0 : i32
    %c0_i32_0 = arith.constant 0 : i32
    return %1, %c0_i32 : i32, i32
  }
  func.func @transform_2(%arg0: i32, %arg1: i32) -> (i32, i32) {
    %c1_i32 = arith.constant 1 : i32
    %0 = arith.muli %arg0, %c1_i32 : i32
    %1 = arith.addi %0, %arg1 : i32
    %c0_i32 = arith.constant 0 : i32
    %c0_i32_0 = arith.constant 0 : i32
    return %1, %c0_i32 : i32, i32
  }
  func.func @transform_3(%arg0: i32, %arg1: i32) -> (i32, i32) {
    %c0_i32 = arith.constant 0 : i32
    %c0_i32_0 = arith.constant 0 : i32
    return %c0_i32, %arg0 : i32, i32
  }
}

</mosaic_0001>

<llo_original>
// kernel: tpu_custom_call.1
$region0: #{tpu_custom_call.1}
  #allocation0 [shape = 'u32[]', space=smem, size = 0x4, offset = 0x4, fixed_abs, tag = 'smem constant byte address 0x4 - core index']
  #allocation1 [shape = 'u32[72,128]{1,0:T(1,128)}', space=vmem, size = 0x9000, scoped, tag = 'internal scratch']
  %s0 = inlined_call_operand.hbm [shape: f32[8,256], index: 0, kind: input, shape index: {}]
  %s1 = inlined_call_operand.hbm [shape: f32[8,256], index: 1, kind: input, shape index: {}]
  %s2 = inlined_call_operand.hbm [shape: f32[8,256], index: 2, kind: input, shape index: {}]
  %s3 = inlined_call_operand.hbm [shape: f32[8,256], index: 3, kind: output, shape index: {}]
  %s4 = sld [smem:[#allocation0]]
  $region38: #{tpu_custom_call.1} parent=0
    _
  %s6 = ssub.s32 1, %s4
  %s7 = scalar_select 0, %s6, %s4
  $region1: #{tpu_custom_call.1} parent=0
    #allocation2 [shape = 'u8[8192]{0}', space=vmem, size = 0x2000, scoped, tag = 'input window, operand 0, single buffered']
    #allocation3 [shape = 's32[1]{0}', space=sflag, size = 0x4, scoped, tag = 'scoped memory for tpu_custom_call.1']
    #allocation4 [shape = 's32[1]{0}', space=sflag, size = 0x4, scoped, tag = 'scoped memory for tpu_custom_call.1']
    #allocation5 [shape = 'u8[8192]{0}', space=vmem, size = 0x2000, scoped, tag = 'input window, operand 1, single buffered']
    #allocation6 [shape = 's32[1]{0}', space=sflag, size = 0x4, scoped, tag = 'scoped memory for tpu_custom_call.1']
    #allocation7 [shape = 'u8[8192]{0}', space=vmem, size = 0x2000, scoped, tag = 'input window, operand 2, single buffered']
    #allocation8 [shape = 'u8[8192]{0}', space=vmem, size = 0x2000, scoped, tag = 'output window, operand 0, single buffered']
    %8 = vsyncpa [#allocation3], 0
    %9 = vsyncpa [#allocation6], 0
    %10 = vsyncpa [#allocation4], 0
    // Predicated region
    $region2: #{tpu_custom_call.1} parent=1 // pred_check
      _
    $region3: #{tpu_custom_call.1} parent=1 // pred_check_branch
      %12 = sbr.rel (0) target = $region5
    $region4: #{tpu_custom_call.1} parent=1 // pred_region
      %s13 = sadd.s32 0, 0
      %15 = vsyncadd [#allocation3], 0
      %s16 = smul.addr %s13, 2
      %s17 = smul.addr %s16, 8
      %s18 = scalar_lea.hbm %s0, %s17
      %s20 = sshll.u32 %s18, 4
      %s21 = int_to_ptr.hbm [resolvable:$true] %s20
      %s22 = sshll.u32 [#allocation2], 4
      %s23 = int_to_ptr.vmem [resolvable:$true] %s22
      %25 = dma.hbm_to_vmem [thread:$0]  %s21, 256, %s23, [#allocation3]
    $region5: #{tpu_custom_call.1} parent=1 // pred_fallthru
      _
    // Predicated region
    $region6: #{tpu_custom_call.1} parent=1 // pred_check
      _
    $region7: #{tpu_custom_call.1} parent=1 // pred_check_branch
      %27 = sbr.rel (0) target = $region9
    $region8: #{tpu_custom_call.1} parent=1 // pred_region
      %s28 = sadd.s32 0, 0
      %30 = vsyncadd [#allocation6], 0
      %s31 = smul.addr %s28, 2
      %s32 = smul.addr %s31, 8
      %s33 = scalar_lea.hbm %s1, %s32
      %s35 = sshll.u32 %s33, 4
      %s36 = int_to_ptr.hbm [resolvable:$true] %s35
      %s37 = sshll.u32 [#allocation5], 4
      %s38 = int_to_ptr.vmem [resolvable:$true] %s37
      %40 = dma.hbm_to_vmem [thread:$0]  %s36, 256, %s38, [#allocation6]
    $region9: #{tpu_custom_call.1} parent=1 // pred_fallthru
      _
    // Predicated region
    $region10: #{tpu_custom_call.1} parent=1 // pred_check
      _
    $region11: #{tpu_custom_call.1} parent=1 // pred_check_branch
      %42 = sbr.rel (0) target = $region13
    $region12: #{tpu_custom_call.1} parent=1 // pred_region
      %s43 = sadd.s32 0, 0
      %45 = vsyncadd [#allocation6], 0
      %s46 = smul.addr %s43, 2
      %s47 = smul.addr %s46, 8
      %s48 = scalar_lea.hbm %s2, %s47
      %s50 = sshll.u32 %s48, 4
      %s51 = int_to_ptr.hbm [resolvable:$true] %s50
      %s52 = sshll.u32 [#allocation7], 4
      %s53 = int_to_ptr.vmem [resolvable:$true] %s52
      %55 = dma.hbm_to_vmem [thread:$0]  %s51, 256, %s53, [#allocation6]
    $region13: #{tpu_custom_call.1} parent=1 // pred_fallthru
      _
    // Predicated region
    $region14: #{tpu_custom_call.1} parent=1 // pred_check
      _
    $region15: #{tpu_custom_call.1} parent=1 // pred_check_branch
      %57 = sbr.rel (0) target = $region17
    $region16: #{tpu_custom_call.1} parent=1 // pred_region
      %59 = dma.done [#allocation3], 256
    $region17: #{tpu_custom_call.1} parent=1 // pred_fallthru
      _
    // Predicated region
    $region18: #{tpu_custom_call.1} parent=1 // pred_check
      _
    $region19: #{tpu_custom_call.1} parent=1 // pred_check_branch
      %61 = sbr.rel (0) target = $region21
    $region20: #{tpu_custom_call.1} parent=1 // pred_region
      %63 = dma.done [#allocation6], 256
    $region21: #{tpu_custom_call.1} parent=1 // pred_fallthru
      _
    // Predicated region
    $region22: #{tpu_custom_call.1} parent=1 // pred_check
      _
    $region23: #{tpu_custom_call.1} parent=1 // pred_check_branch
      %65 = sbr.rel (0) target = $region25
    $region24: #{tpu_custom_call.1} parent=1 // pred_region
      %67 = dma.done [#allocation6], 256
    $region25: #{tpu_custom_call.1} parent=1 // pred_fallthru
      _
    %s68 = sadd.s32 0, 0
    %s69 = sadd.s32 0, 0
    %s70 = sadd.s32 0, 0
    %p71 = scmp.eq.s32.totalorder 0, 0
    // Predicated region
    $region26: #{tpu_custom_call.1} parent=1 // pred_check
      %p72 = pneg %p71
    $region27: #{tpu_custom_call.1} parent=1 // pred_check_branch
      %74 = sbr.rel (%p72) target = $region29
    $region28: #{tpu_custom_call.1} parent=1 // pred_region
      %75 = vst [vmem:[#allocation8] sm:$0xff] 0.0
      %76 = vst [vmem:[#allocation8 + $0x8] sm:$0xff] 0.0
    $region29: #{tpu_custom_call.1} parent=1 // pred_fallthru
      _
    %v77 = vld [vmem:[#allocation2] sm:$0xff]
    %v78 = vld [vmem:[#allocation2 + $0x8] sm:$0xff]
    %v79 = vld [vmem:[#allocation5] sm:$0xff]
    %v80 = vld [vmem:[#allocation5 + $0x8] sm:$0xff]
    %v81 = vmul.f32 %v77, %v79
    %v82 = vmul.f32 %v78, %v80
    %83 = vrot.lane.b32.xlu0 %v81, 127
    %v84 = vpop.permute.xlu0 %83
    %85 = vrot.lane.b32.xlu0 %v82, 127
    %v86 = vpop.permute.xlu0 %85
    %v87 = vlaneseq
    %v88 = vand.u32 %v87, 127
    %vm89 = vcmp.lt.s32.totalorder %v88, 127
    %v90 = vsel %vm89, %v84, %v86
    %v91 = vsel %vm89, %v86, %v84
    %v92 = vadd.f32 %v81, %v90
    %v93 = vadd.f32 %v82, %v91
    %v94 = vmul.f32 %v77, %v77
    %v95 = vmul.f32 %v78, %v78
    %96 = vrot.lane.b32.xlu0 %v94, 127
    %v97 = vpop.permute.xlu0 %96
    %98 = vrot.lane.b32.xlu0 %v95, 127
    %v99 = vpop.permute.xlu0 %98
    %v100 = vsel %vm89, %v97, %v99
    %v101 = vsel %vm89, %v99, %v97
    %v102 = vadd.f32 %v94, %v100
    %v103 = vadd.f32 %v95, %v101
    %v104 = vmul.f32 %v79, %v79
    %v105 = vmul.f32 %v80, %v80
    %106 = vrot.lane.b32.xlu0 %v104, 127
    %v107 = vpop.permute.xlu0 %106
    %108 = vrot.lane.b32.xlu0 %v105, 127
    %v109 = vpop.permute.xlu0 %108
    %v110 = vsel %vm89, %v107, %v109
    %v111 = vsel %vm89, %v109, %v107
    %v112 = vadd.f32 %v104, %v110
    %v113 = vadd.f32 %v105, %v111
    %v114 = vmul.f32 %v102, %v112
    %v115 = vmul.f32 %v103, %v113
    %v116 = vmax.f32 %v114, 1e-16
    %v117 = vmax.f32 %v115, 1e-16
    %v118 = vrsqrt.pop %v116
    %v119 = vmul.f32 %v118, %v116
    %v120 = vmul.f32 %v119, %v118
    %v121 = vmul.f32 0.5, %v120
    %v122 = vsub.f32 1.5, %v121
    %v123 = vmul.f32 %v118, %v122
    %vm124 = vweird.f32 %v116
    %vm125 = vweird.f32 %v118
    %vm126 = vmor %vm124, %vm125
    %v127 = vsel %vm126, %v118, %v123
    %v128 = vrsqrt.pop %v117
    %v129 = vmul.f32 %v128, %v117
    %v130 = vmul.f32 %v129, %v128
    %v131 = vmul.f32 0.5, %v130
    %v132 = vsub.f32 1.5, %v131
    %v133 = vmul.f32 %v128, %v132
    %vm134 = vweird.f32 %v117
    %vm135 = vweird.f32 %v128
    %vm136 = vmor %vm134, %vm135
    %v137 = vsel %vm136, %v128, %v133
    %v138 = vmul.f32 %v92, %v127
    %v139 = vmul.f32 %v93, %v137
    %v140 = vld [vmem:[#allocation7] sm:$0xff]
    %v141 = vld [vmem:[#allocation7 + $0x8] sm:$0xff]
    %v142 = vsub.f32 1.0, %v138
    %v143 = vsub.f32 1.0, %v139
    %v144 = vmul.f32 %v142, %v140
    %v145 = vmul.f32 %v143, %v141
    %v146 = vld [vmem:[#allocation8] sm:$0xff]
    %v147 = vld [vmem:[#allocation8 + $0x8] sm:$0xff]
    %v148 = vadd.f32 %v146, %v144
    %v149 = vadd.f32 %v147, %v145
    %150 = vst [vmem:[#allocation8] sm:$0xff] %v148
    %151 = vst [vmem:[#allocation8 + $0x8] sm:$0xff] %v149
    // Predicated region
    $region30: #{tpu_custom_call.1} parent=1 // pred_check
      _
    $region31: #{tpu_custom_call.1} parent=1 // pred_check_branch
      %153 = sbr.rel (0) target = $region33
    $region32: #{tpu_custom_call.1} parent=1 // pred_region
      %155 = vsyncadd [#allocation4], 0
      %s157 = sshll.u32 [#allocation8], 4
      %s158 = int_to_ptr.vmem [resolvable:$true] %s157
      %s159 = sshll.u32 %s3, 4
      %s160 = int_to_ptr.hbm [resolvable:$true] %s159
      %162 = dma.vmem_to_hbm [thread:$0]  %s158, 256, %s160, [#allocation4]
    $region33: #{tpu_custom_call.1} parent=1 // pred_fallthru
      _
    // Predicated region
    $region34: #{tpu_custom_call.1} parent=1 // pred_check
      _
    $region35: #{tpu_custom_call.1} parent=1 // pred_check_branch
      %164 = sbr.rel (0) target = $region37
    $region36: #{tpu_custom_call.1} parent=1 // pred_region
      %166 = dma.done [#allocation4], 256
    $region37: #{tpu_custom_call.1} parent=1 // pred_fallthru
      _
    %167 = vsyncpa [#allocation3], 1
    %168 = vsyncpa [#allocation6], 1
    %169 = vsyncpa [#allocation4], 1

</llo_original>
